<compile_context>
chip_gen: v7x
topology: tpu7x:2x2x1
jax: 0.10.0
libtpu: 0.0.40
codegen_flags: <defaults>
</compile_context>

<pallas_src>
import functools
import math

import jax
import jax.numpy as jnp
from jax.experimental import pallas as pl
from jax.experimental.pallas import tpu as pltpu


LANE = 128


def _round_up(v, m):
    return ((v + m - 1) // m) * m


# ----------------------------------------------------------------------------
# Fused kernel: deconv(1x1 latent) + bias + LeakyReLU + block-diag toRGB + bias
# ----------------------------------------------------------------------------
def _zerogen_kernel(z_ref, wd_ref, bd_ref, wrgb_ref, brgb_ref,
                    x_ref, rgb_ref, *, slope):
    # ConvTranspose2d(z_dim, z_dim, window) on the 1x1 latent == one MXU matmul
    #   (tm, z_dim)bf16 x (z_dim, taps*z_dim)bf16 -> f32
    acc = jnp.dot(z_ref[...], wd_ref[...], preferred_element_type=jnp.float32)
    acc = acc + bd_ref[...]                        # bias (f32 epilogue)
    x = jnp.where(acc >= 0.0, acc, slope * acc)    # LeakyReLU in f32 (v5e-safe)
    xb = x.astype(jnp.bfloat16)
    x_ref[...] = xb                                # bf16, lane-dense store

    # toRGB (Conv2d z_dim->3, 1x1) over all taps as ONE block-diagonal matmul:
    #   (tm, taps*z_dim)bf16 x (taps*z_dim, 128)bf16 -> f32
    rgb = jnp.dot(xb, wrgb_ref[...], preferred_element_type=jnp.float32)
    rgb_ref[...] = rgb + brgb_ref[...]


# ----------------------------------------------------------------------------
# Parameters: synthetic PyTorch-layout weights, compact-packed ONCE at init.
# ----------------------------------------------------------------------------
def build_zerogen_params(key, z_dim=32, window=4):
    k0, k1, k2, k3 = jax.random.split(key, 4)
    taps = window * window
    xw = taps * z_dim                    # packed x width (16*32 = 512, lane-dense)
    rgbw = _round_up(taps * 3, LANE)     # 48 -> 128

    # PyTorch layouts: ConvTranspose2d weight (Cin, Cout, kh, kw); Conv2d (3, Cin, 1, 1).
    wd = (jax.random.normal(k0, (z_dim, z_dim, window, window), jnp.float32)
          * (1.0 / math.sqrt(z_dim)))
    bd = jax.random.normal(k1, (z_dim,), jnp.float32) * 0.1
    wrgb = (jax.random.normal(k2, (3, z_dim, 1, 1), jnp.float32)
            * (1.0 / math.sqrt(z_dim)))
    brgb = jax.random.normal(k3, (3,), jnp.float32) * 0.1

    # Deconv weight -> (z_dim, taps*z_dim); columns packed (tap, cout). No K/N padding.
    wd_p = (jnp.transpose(wd, (0, 2, 3, 1))      # (cin, kh, kw, cout)
            .reshape(z_dim, xw).astype(jnp.bfloat16))
    bd_p = jnp.broadcast_to(bd, (taps, z_dim)).reshape(1, xw).astype(jnp.float32)

    # toRGB weight -> block diagonal (taps*z_dim, rgbw): block t maps tap t's
    # z_dim channels to its 3 rgb columns (columns 48..127 are zero padding).
    w2d = wrgb[:, :, 0, 0].T                                        # (z_dim, 3)
    blockdiag = (jnp.eye(taps, dtype=jnp.float32)[:, None, :, None]
                 * w2d[None, :, None, :]).reshape(xw, taps * 3)
    wrgb_p = (jnp.zeros((xw, rgbw), jnp.float32)
              .at[:, :taps * 3].set(blockdiag).astype(jnp.bfloat16))
    brgb_p = (jnp.zeros((1, rgbw), jnp.float32)
              .at[0, :taps * 3].set(jnp.tile(brgb, taps)))

    params = dict(wd_p=wd_p, bd_p=bd_p, wrgb_p=wrgb_p, brgb_p=brgb_p,
                  z_dim=z_dim, window=window, taps=taps, xw=xw, rgbw=rgbw)
    torch_params = dict(wd=wd, bd=bd, wrgb=wrgb, brgb=brgb)
    return params, torch_params


# ----------------------------------------------------------------------------
# Forward wrapper: one pallas_call for the whole block.
# ----------------------------------------------------------------------------
def zerogen_forward(params, z_nchw, *, slope=0.2, nchw_out=True):
    n, cin, hin, win = z_nchw.shape
    # TODO(synk): general Hin/Win > 1 transposed-conv path; ZeroGenBlock's
    # intended input is the (N, z_dim, 1, 1) latent.
    assert hin == 1 and win == 1, "ZeroGenBlock expects a (N, z_dim, 1, 1) latent"
    z_dim, window, taps = params["z_dim"], params["window"], params["taps"]
    xw, rgbw = params["xw"], params["rgbw"]
    assert cin == z_dim

    # M tiling: one block for small batches, 256-row tiles for training batches
    # (double-buffered z / x / rgb DMA, bounded vreg pressure, megacore-parallel
    # on v7x).  16-row multiples keep bf16 sublane tiles aligned.
    tm_cap = 256
    mp = _round_up(max(n, 16), 16)
    if mp <= tm_cap:
        tm = mp
    else:
        tm = tm_cap
        mp = _round_up(n, tm)
    grid_m = mp // tm

    # Only runtime padding: batch rows of the tiny latent (bf16 MXU operand).
    z_p = (jnp.zeros((mp, z_dim), jnp.bfloat16)
           .at[:n].set(z_nchw[:, :, 0, 0].astype(jnp.bfloat16)))

    kernel = functools.partial(_zerogen_kernel, slope=slope)

    # Cost estimate from the compact (un-padded-channel) kernel shapes.
    flops = 2 * mp * z_dim * xw + 2 * mp * xw * rgbw
    bytes_accessed = (z_p.size * 2
                      + params["wd_p"].size * 2 + params["bd_p"].size * 4
                      + params["wrgb_p"].size * 2 + params["brgb_p"].size * 4
                      + mp * xw * 2 + mp * rgbw * 4)

    x_pad, rgb_pad = pl.pallas_call(
        kernel,
        out_shape=(jax.ShapeDtypeStruct((mp, xw), jnp.bfloat16),
                   jax.ShapeDtypeStruct((mp, rgbw), jnp.float32)),
        grid=(grid_m,),
        in_specs=[
            pl.BlockSpec((tm, z_dim), lambda i: (i, 0)),
            pl.BlockSpec((z_dim, xw), lambda i: (0, 0)),   # weights resident
            pl.BlockSpec((1, xw), lambda i: (0, 0)),
            pl.BlockSpec((xw, rgbw), lambda i: (0, 0)),
            pl.BlockSpec((1, rgbw), lambda i: (0, 0)),
        ],
        out_specs=(
            pl.BlockSpec((tm, xw), lambda i: (i, 0)),
            pl.BlockSpec((tm, rgbw), lambda i: (i, 0)),
        ),
        compiler_params=pltpu.CompilerParams(
            dimension_semantics=("parallel",),   # shard batch tiles on v7x megacore
            vmem_limit_bytes=16 * 1024 * 1024,   # working set << limit on all gens
        ),
        cost_estimate=pl.CostEstimate(flops=flops, transcendentals=0,
                                      bytes_accessed=bytes_accessed),
    )(z_p, params["wd_p"], params["bd_p"], params["wrgb_p"], params["brgb_p"])

    if not nchw_out:
        # Packed (N, taps*C) / (N, taps*3) layout for a downstream JAX/Pallas
        # consumer: skips the per-call NCHW relayout entirely.
        return x_pad[:n], rgb_pad[:n, :taps * 3]

    # Un-pad once and return PyTorch NCHW layout (f32, matching the module).
    x = (x_pad[:n].astype(jnp.float32)
         .reshape(n, window, window, z_dim).transpose(0, 3, 1, 2))
    rgb = (rgb_pad[:n, :taps * 3]
           .reshape(n, window, window, 3).transpose(0, 3, 1, 2))
    return x, rgb


# ----------------------------------------------------------------------------
# Plain-JAX reference (mirrors the PyTorch forward) for a correctness check.
# ----------------------------------------------------------------------------
def zerogen_ref(tp, z_nchw, slope=0.2):
    z2d = z_nchw[:, :, 0, 0]
    x = jnp.einsum('nc,cdij->ndij', z2d, tp["wd"]) + tp["bd"][None, :, None, None]
    x = jnp.where(x >= 0.0, x, slope * x)
    rgb = (jnp.einsum('ndij,rd->nrij', x, tp["wrgb"][:, :, 0, 0])
           + tp["brgb"][None, :, None, None])
    return x, rgb


# ----------------------------------------------------------------------------
if __name__ == "__main__":
    key = jax.random.PRNGKey(0)
    k_z, k_p = jax.random.split(key)

    batch, z_dim, window = 2, 32, 4
    z = jax.random.normal(k_z, (batch, z_dim, 1, 1), jnp.float32)

    params, torch_params = build_zerogen_params(k_p, z_dim=z_dim, window=window)

    fwd = jax.jit(functools.partial(zerogen_forward, params))
    x, rgb = fwd(z)
    x, rgb = jax.block_until_ready((x, rgb))

    assert x.shape == (batch, z_dim, window, window), x.shape
    assert rgb.shape == (batch, 3, window, window), rgb.shape
    assert jnp.all(jnp.isfinite(x)) and jnp.all(jnp.isfinite(rgb))

    # NOTE: z and the post-LeakyReLU x are bf16 MXU operands, so results carry
    # ~1e-2 relative error vs the all-f32 reference (within the 5e-2 tolerance).
    x_ref, rgb_ref = zerogen_ref(torch_params, z)
    assert jnp.allclose(x, x_ref, rtol=5e-2, atol=5e-2)
    assert jnp.allclose(rgb, rgb_ref, rtol=5e-2, atol=5e-2)

    print("KERNEL_OK")
</pallas_src>

<mosaic_0001>
module attributes {stable_mosaic.version = 11 : i64} {
  func.func @_zerogen_kernel(%arg0: i32, %arg1: memref<16x32xbf16, #tpu.memory_space<vmem>>, %arg2: memref<32x512xbf16, #tpu.memory_space<vmem>>, %arg3: memref<1x512xf32, #tpu.memory_space<vmem>>, %arg4: memref<512x128xbf16, #tpu.memory_space<vmem>>, %arg5: memref<1x128xf32, #tpu.memory_space<vmem>>, %arg6: memref<16x512xbf16, #tpu.memory_space<vmem>>, %arg7: memref<16x128xf32, #tpu.memory_space<vmem>>) attributes {dimension_semantics = [#tpu.dimension_semantics<parallel>], iteration_bounds = array<i64: 1>, scalar_prefetch = 0 : i64, scratch_operands = 0 : i64, tpu.core_type = #tpu.core_type<tc>, window_params = [{transform_indices = @transform_0, window_bounds = array<i64: 16, 32>}, {pipeline_mode = #tpu.pipeline_mode<synchronous>, transform_indices = @transform_1, window_bounds = array<i64: 32, 512>}, {pipeline_mode = #tpu.pipeline_mode<synchronous>, transform_indices = @transform_2, window_bounds = array<i64: 1, 512>}, {pipeline_mode = #tpu.pipeline_mode<synchronous>, transform_indices = @transform_3, window_bounds = array<i64: 512, 128>}, {pipeline_mode = #tpu.pipeline_mode<synchronous>, transform_indices = @transform_4, window_bounds = array<i64: 1, 128>}, {transform_indices = @transform_5, window_bounds = array<i64: 16, 512>}, {transform_indices = @transform_6, window_bounds = array<i64: 16, 128>}]} {
    %c0 = arith.constant 0 : index
    %c0_0 = arith.constant 0 : index
    %0 = vector.load %arg1[%c0, %c0_0] : memref<16x32xbf16, #tpu.memory_space<vmem>>, vector<16x32xbf16>
    %c0_1 = arith.constant 0 : index
    %c0_2 = arith.constant 0 : index
    %1 = vector.load %arg2[%c0_1, %c0_2] : memref<32x512xbf16, #tpu.memory_space<vmem>>, vector<32x512xbf16>
    %cst = arith.constant dense<0.000000e+00> : vector<16x512xf32>
    %2 = tpu.matmul %0, %1, %cst {dimension_numbers = #tpu.dot_dimension_numbers<[1], [0], [0], [1], [0, 0, 1, 1], [], []>} : vector<16x32xbf16>, vector<32x512xbf16>, vector<16x512xf32> -> vector<16x512xf32>
    %c0_3 = arith.constant 0 : index
    %c0_4 = arith.constant 0 : index
    %3 = vector.load %arg3[%c0_3, %c0_4] : memref<1x512xf32, #tpu.memory_space<vmem>>, vector<1x512xf32>
    %4 = vector.broadcast %3 : vector<1x512xf32> to vector<16x512xf32>
    %5 = arith.addf %2, %4 : vector<16x512xf32>
    %cst_5 = arith.constant 0.000000e+00 : f32
    %6 = vector.broadcast %cst_5 : f32 to vector<16x512xf32>
    %7 = arith.cmpf oge, %5, %6 : vector<16x512xf32>
    %cst_6 = arith.constant 2.000000e-01 : f32
    %8 = vector.broadcast %cst_6 : f32 to vector<16x512xf32>
    %9 = arith.mulf %8, %5 : vector<16x512xf32>
    %10 = arith.select %7, %5, %9 : vector<16x512xi1>, vector<16x512xf32>
    %11 = arith.truncf %10 : vector<16x512xf32> to vector<16x512xbf16>
    %c0_7 = arith.constant 0 : index
    %c0_8 = arith.constant 0 : index
    %12 = vector.load %arg6[%c0_7, %c0_8] : memref<16x512xbf16, #tpu.memory_space<vmem>>, vector<16x512xbf16>
    tpu.vector_store %arg6[%c0_7, %c0_8], %11 {strides = array<i32>} : memref<16x512xbf16, #tpu.memory_space<vmem>>, vector<16x512xbf16>,
    %c0_9 = arith.constant 0 : index
    %c0_10 = arith.constant 0 : index
    %13 = vector.load %arg4[%c0_9, %c0_10] : memref<512x128xbf16, #tpu.memory_space<vmem>>, vector<512x128xbf16>
    %cst_11 = arith.constant dense<0.000000e+00> : vector<16x128xf32>
    %14 = tpu.matmul %11, %13, %cst_11 {dimension_numbers = #tpu.dot_dimension_numbers<[1], [0], [0], [1], [0, 0, 1, 1], [], []>} : vector<16x512xbf16>, vector<512x128xbf16>, vector<16x128xf32> -> vector<16x128xf32>
    %c0_12 = arith.constant 0 : index
    %c0_13 = arith.constant 0 : index
    %15 = vector.load %arg5[%c0_12, %c0_13] : memref<1x128xf32, #tpu.memory_space<vmem>>, vector<1x128xf32>
    %16 = vector.broadcast %15 : vector<1x128xf32> to vector<16x128xf32>
    %17 = arith.addf %14, %16 : vector<16x128xf32>
    %c0_14 = arith.constant 0 : index
    %c0_15 = arith.constant 0 : index
    %18 = vector.load %arg7[%c0_14, %c0_15] : memref<16x128xf32, #tpu.memory_space<vmem>>, vector<16x128xf32>
    tpu.vector_store %arg7[%c0_14, %c0_15], %17 {strides = array<i32>} : memref<16x128xf32, #tpu.memory_space<vmem>>, vector<16x128xf32>,
    return
  }
  func.func @transform_0(%arg0: i32) -> (i32, i32) {
    %c0_i32 = arith.constant 0 : i32
    %c0_i32_0 = arith.constant 0 : i32
    return %arg0, %c0_i32 : i32, i32
  }
  func.func @transform_1(%arg0: i32) -> (i32, i32) {
    %c0_i32 = arith.constant 0 : i32
    %c0_i32_0 = arith.constant 0 : i32
    %c0_i32_1 = arith.constant 0 : i32
    return %c0_i32, %c0_i32_0 : i32, i32
  }
  func.func @transform_2(%arg0: i32) -> (i32, i32) {
    %c0_i32 = arith.constant 0 : i32
    %c0_i32_0 = arith.constant 0 : i32
    %c0_i32_1 = arith.constant 0 : i32
    return %c0_i32, %c0_i32_0 : i32, i32
  }
  func.func @transform_3(%arg0: i32) -> (i32, i32) {
    %c0_i32 = arith.constant 0 : i32
    %c0_i32_0 = arith.constant 0 : i32
    %c0_i32_1 = arith.constant 0 : i32
    return %c0_i32, %c0_i32_0 : i32, i32
  }
  func.func @transform_4(%arg0: i32) -> (i32, i32) {
    %c0_i32 = arith.constant 0 : i32
    %c0_i32_0 = arith.constant 0 : i32
    %c0_i32_1 = arith.constant 0 : i32
    return %c0_i32, %c0_i32_0 : i32, i32
  }
  func.func @transform_5(%arg0: i32) -> (i32, i32) {
    %c0_i32 = arith.constant 0 : i32
    %c0_i32_0 = arith.constant 0 : i32
    return %arg0, %c0_i32 : i32, i32
  }
  func.func @transform_6(%arg0: i32) -> (i32, i32) {
    %c0_i32 = arith.constant 0 : i32
    %c0_i32_0 = arith.constant 0 : i32
    return %arg0, %c0_i32 : i32, i32
  }
}

</mosaic_0001>

<llo_original>
// kernel: zerogen_forward.1
$region0: #{zerogen_forward.1}
  #allocation0 [shape = 'u32[]', space=smem, size = 0x4, offset = 0x4, fixed_abs, tag = 'smem constant byte address 0x4 - core index']
  #allocation1 [shape = 'u32[144,128]{1,0:T(1,128)}', space=vmem, size = 0x12000, scoped, tag = 'internal scratch']
  %s0 = inlined_call_operand.vmem [shape: bf16[16,32], index: 0, kind: input, shape index: {}]
  %s1 = inlined_call_operand.vmem [shape: bf16[32,512], index: 1, kind: input, shape index: {}]
  %s2 = inlined_call_operand.vmem [shape: f32[1,512], index: 2, kind: input, shape index: {}]
  %s3 = inlined_call_operand.hbm [shape: bf16[512,128], index: 3, kind: input, shape index: {}]
  %s4 = inlined_call_operand.vmem [shape: f32[1,128], index: 4, kind: input, shape index: {}]
  %s5 = inlined_call_operand.vmem [shape: bf16[16,512], index: 5, kind: output, shape index: {0}]
  %s6 = inlined_call_operand.vmem [shape: f32[16,128], index: 6, kind: output, shape index: {1}]
  %7 = xla_tuple %s5, %s6
  %s8 = sld [smem:[#allocation0]]
  $region42: #{zerogen_forward.1} parent=0
    _
  %s10 = ssub.s32 1, %s8
  %s11 = scalar_select 0, %s10, %s8
  $region1: #{zerogen_forward.1} parent=0
    #allocation2 [shape = 'u8[131072]{0}', space=vmem, size = 0x20000, scoped, tag = 'input window, operand 3, single buffered']
    #allocation3 [shape = 's32[1]{0}', space=sflag, size = 0x4, scoped, tag = 'scoped memory for zerogen_forward.1']
    %12 = vsyncpa [#allocation3], 0
    // Predicated region
    $region2: #{zerogen_forward.1} parent=1 // pred_check
      _
    $region3: #{zerogen_forward.1} parent=1 // pred_check_branch
      %14 = sbr.rel (0) target = $region5
    $region4: #{zerogen_forward.1} parent=1 // pred_region
      _
    $region5: #{zerogen_forward.1} parent=1 // pred_fallthru
      _
    // Predicated region
    $region6: #{zerogen_forward.1} parent=1 // pred_check
      _
    $region7: #{zerogen_forward.1} parent=1 // pred_check_branch
      %16 = sbr.rel (0) target = $region9
    $region8: #{zerogen_forward.1} parent=1 // pred_region
      _
    $region9: #{zerogen_forward.1} parent=1 // pred_fallthru
      _
    // Predicated region
    $region10: #{zerogen_forward.1} parent=1 // pred_check
      _
    $region11: #{zerogen_forward.1} parent=1 // pred_check_branch
      %18 = sbr.rel (0) target = $region13
    $region12: #{zerogen_forward.1} parent=1 // pred_region
      _
    $region13: #{zerogen_forward.1} parent=1 // pred_fallthru
      _
    // Predicated region
    $region14: #{zerogen_forward.1} parent=1 // pred_check
      _
    $region15: #{zerogen_forward.1} parent=1 // pred_check_branch
      %20 = sbr.rel (0) target = $region17
    $region16: #{zerogen_forward.1} parent=1 // pred_region
      %s22 = ssub.s32 4096, 4096
      %23 = vsyncadd [#allocation3], %s22
      %s24 = sshll.u32 [#allocation2], 4
      %s25 = int_to_ptr.vmem [resolvable:$true] %s24
      %30 = dma.hbm_to_vmem [thread:$0]  %s3, 4096, %s25, [#allocation3], 64, 64, 4
    $region17: #{zerogen_forward.1} parent=1 // pred_fallthru
      _
    // Predicated region
    $region18: #{zerogen_forward.1} parent=1 // pred_check
      _
    $region19: #{zerogen_forward.1} parent=1 // pred_check_branch
      %32 = sbr.rel (0) target = $region21
    $region20: #{zerogen_forward.1} parent=1 // pred_region
      _
    $region21: #{zerogen_forward.1} parent=1 // pred_fallthru
      _
    // Predicated region
    $region22: #{zerogen_forward.1} parent=1 // pred_check
      _
    $region23: #{zerogen_forward.1} parent=1 // pred_check_branch
      %34 = sbr.rel (0) target = $region25
    $region24: #{zerogen_forward.1} parent=1 // pred_region
      %35 = dma.done [#allocation3], 4096
    $region25: #{zerogen_forward.1} parent=1 // pred_fallthru
      _
    %v37 = vld [vmem:[%s0] sm:$0xf]
    %v38 = vld [vmem:[%s0 + $0x4] sm:$0xf]
    %v39 = vld [vmem:[%s1] sm:$0xff]
    %v40 = vld [vmem:[%s1 + $0x8] sm:$0xff]
    %v41 = vld [vmem:[%s1 + $0x10] sm:$0xff]
    %v42 = vld [vmem:[%s1 + $0x18] sm:$0xff]
    %v43 = vld [vmem:[%s1 + $0x20] sm:$0xff]
    %v44 = vld [vmem:[%s1 + $0x28] sm:$0xff]
    %v45 = vld [vmem:[%s1 + $0x30] sm:$0xff]
    %v46 = vld [vmem:[%s1 + $0x38] sm:$0xff]
    %v47 = vld [vmem:[%s2] sm:$0xf]
    %v49 = vlaneseq
    %v50 = vshrl.u32 %v49, 7
    %v51 = vsub.s32 0, %v50
    %v52 = vrot.slane %v47, %v51
    %v53 = vlaneseq
    %v54 = vshrl.u32 %v53, 7
    %v55 = vsub.s32 1, %v54
    %v56 = vrot.slane %v47, %v55
    %v57 = vlaneseq
    %v58 = vshrl.u32 %v57, 7
    %v59 = vsub.s32 2, %v58
    %v60 = vrot.slane %v47, %v59
    %v61 = vlaneseq
    %v62 = vshrl.u32 %v61, 7
    %v63 = vsub.s32 3, %v62
    %v64 = vrot.slane %v47, %v63
    %v71 = vunpack.c.l.b16 %v37
    %v72 = vunpack.c.l.b16 %v38
    %v73 = vpack.c.b16 %v72, %v71
    %v82 = vunpack.c.l.b16 %v39
    %v83 = vunpack.c.h.b16 %v39
    %v84 = vunpack.c.l.b16 %v40
    %v85 = vunpack.c.h.b16 %v40
    %v86 = vunpack.c.l.b16 %v41
    %v87 = vunpack.c.h.b16 %v41
    %v88 = vunpack.c.l.b16 %v42
    %v89 = vunpack.c.h.b16 %v42
    %v90 = vunpack.c.l.b16 %v43
    %v91 = vunpack.c.h.b16 %v43
    %v92 = vunpack.c.l.b16 %v44
    %v93 = vunpack.c.h.b16 %v44
    %v94 = vunpack.c.l.b16 %v45
    %v95 = vunpack.c.h.b16 %v45
    %v96 = vunpack.c.l.b16 %v46
    %v97 = vunpack.c.h.b16 %v46
    %v98 = vpack.c.b16 %v86, %v82
    %v99 = vpack.c.b16 %v87, %v83
    %v100 = vpack.c.b16 %v88, %v84
    %v101 = vpack.c.b16 %v89, %v85
    %v102 = vpack.c.b16 %v94, %v90
    %v103 = vpack.c.b16 %v95, %v91
    %v104 = vpack.c.b16 %v96, %v92
    %v105 = vpack.c.b16 %v97, %v93
    %vm114 = vcmask 261120
    %v116 = vsel %vm114, %v73, 0
    %118 = vmatprep.subr.bf16.mxu0 %v99
    %119 = vmatpush1.bf16.msra.mxu0 %v98
    %120 = vmatprep.subr.bf16.mxu0 %v103
    %121 = vmatpush1.bf16.msra.mxu0 %v102
    %122 = vmatprep.subr.bf16.mxu0 0
    %123 = vmatpush1.bf16.msra.mxu0 0
    %124 = vmatprep.subr.bf16.mxu0 0
    %125 = vmatpush1.bf16.msra.mxu0 0
    %126 = vmatprep.subr.bf16.mxu0 0
    %127 = vmatpush1.bf16.msra.mxu0 0
    %128 = vmatprep.subr.bf16.mxu0 0
    %129 = vmatpush1.bf16.msra.mxu0 0
    %130 = vmatprep.subr.bf16.mxu0 0
    %131 = vmatpush1.bf16.msra.mxu0 0
    %132 = vmatprep.subr.bf16.mxu0 0
    %133 = vmatpush1.bf16.msra.mxu0 0
    %134 = vmatprep.subr.bf16.mxu0 0
    %135 = vmatpush1.bf16.msra.mxu0 0
    %136 = vmatprep.subr.bf16.mxu0 0
    %137 = vmatpush1.bf16.msra.mxu0 0
    %138 = vmatprep.subr.bf16.mxu0 0
    %139 = vmatpush1.bf16.msra.mxu0 0
    %140 = vmatprep.subr.bf16.mxu0 0
    %141 = vmatpush1.bf16.msra.mxu0 0
    %142 = vmatprep.subr.bf16.mxu0 0
    %143 = vmatpush1.bf16.msra.mxu0 0
    %144 = vmatprep.subr.bf16.mxu0 0
    %145 = vmatpush1.bf16.msra.mxu0 0
    %146 = vmatprep.subr.bf16.mxu0 0
    %147 = vmatpush1.bf16.msra.mxu0 0
    %148 = vmatprep.subr.bf16.mxu0 0
    %149 = vmatpush1.bf16.msra.mxu0 0
    %150 = vmatprep.mubr.bf16.mxu0 0
    %151 = vmatmul.mubr.bf16.gmra.mrb[0].mxu0 %v116
    %v152 = vpop.f32.mrb[0].mxu0
    %v153 = vadd.f32 %v52, %v152
    %v154 = vpop.f32.mrb[0].mxu0
    %v155 = vadd.f32 %v56, %v154
    %v156 = vpop.f32.mrb[0].mxu0
    %v157 = vadd.f32 %v52, %v156
    %v158 = vpop.f32.mrb[0].mxu0
    %v159 = vadd.f32 %v56, %v158
    %160 = vdwg.mxu0
    %161 = vmatprep.subr.bf16.mxu0 %v101
    %162 = vmatpush1.bf16.msra.mxu0 %v100
    %163 = vmatprep.subr.bf16.mxu0 %v105
    %164 = vmatpush1.bf16.msra.mxu0 %v104
    %165 = vmatprep.subr.bf16.mxu0 0
    %166 = vmatpush1.bf16.msra.mxu0 0
    %167 = vmatprep.subr.bf16.mxu0 0
    %168 = vmatpush1.bf16.msra.mxu0 0
    %169 = vmatprep.subr.bf16.mxu0 0
    %170 = vmatpush1.bf16.msra.mxu0 0
    %171 = vmatprep.subr.bf16.mxu0 0
    %172 = vmatpush1.bf16.msra.mxu0 0
    %173 = vmatprep.subr.bf16.mxu0 0
    %174 = vmatpush1.bf16.msra.mxu0 0
    %175 = vmatprep.subr.bf16.mxu0 0
    %176 = vmatpush1.bf16.msra.mxu0 0
    %177 = vmatprep.subr.bf16.mxu0 0
    %178 = vmatpush1.bf16.msra.mxu0 0
    %179 = vmatprep.subr.bf16.mxu0 0
    %180 = vmatpush1.bf16.msra.mxu0 0
    %181 = vmatprep.subr.bf16.mxu0 0
    %182 = vmatpush1.bf16.msra.mxu0 0
    %183 = vmatprep.subr.bf16.mxu0 0
    %184 = vmatpush1.bf16.msra.mxu0 0
    %185 = vmatprep.subr.bf16.mxu0 0
    %186 = vmatpush1.bf16.msra.mxu0 0
    %187 = vmatprep.subr.bf16.mxu0 0
    %188 = vmatpush1.bf16.msra.mxu0 0
    %189 = vmatprep.subr.bf16.mxu0 0
    %190 = vmatpush1.bf16.msra.mxu0 0
    %191 = vmatprep.subr.bf16.mxu0 0
    %192 = vmatpush1.bf16.msra.mxu0 0
    %193 = vmatprep.mubr.bf16.mxu0 0
    %194 = vmatmul.mubr.bf16.gmra.mrb[0].mxu0 %v116
    %v195 = vpop.f32.mrb[0].mxu0
    %v196 = vadd.f32 %v60, %v195
    %v197 = vpop.f32.mrb[0].mxu0
    %v198 = vadd.f32 %v64, %v197
    %v199 = vpop.f32.mrb[0].mxu0
    %v200 = vadd.f32 %v60, %v199
    %v201 = vpop.f32.mrb[0].mxu0
    %v202 = vadd.f32 %v64, %v201
    %203 = vdwg.mxu0
    %vm204 = vcmp.ge.f32.partialorder %v153, 0.0
    %vm205 = vcmp.ge.f32.partialorder %v155, 0.0
    %vm206 = vcmp.ge.f32.partialorder %v196, 0.0
    %vm207 = vcmp.ge.f32.partialorder %v198, 0.0
    %vm208 = vcmp.ge.f32.partialorder %v157, 0.0
    %vm209 = vcmp.ge.f32.partialorder %v159, 0.0
    %vm210 = vcmp.ge.f32.partialorder %v200, 0.0
    %vm211 = vcmp.ge.f32.partialorder %v202, 0.0
    %v212 = vmul.f32 %v153, 0.2
    %v213 = vmul.f32 %v155, 0.2
    %v214 = vmul.f32 %v196, 0.2
    %v215 = vmul.f32 %v198, 0.2
    %v216 = vmul.f32 %v157, 0.2
    %v217 = vmul.f32 %v159, 0.2
    %v218 = vmul.f32 %v200, 0.2
    %v219 = vmul.f32 %v202, 0.2
    %v220 = vsel %vm204, %v153, %v212
    %v221 = vsel %vm205, %v155, %v213
    %v222 = vsel %vm206, %v196, %v214
    %v223 = vsel %vm207, %v198, %v215
    %v224 = vsel %vm208, %v157, %v216
    %v225 = vsel %vm209, %v159, %v217
    %v226 = vsel %vm210, %v200, %v218
    %v227 = vsel %vm211, %v202, %v219
    %v228 = vpack.c.bf16 %v224, %v220
    %v229 = vpack.c.bf16 %v225, %v221
    %v230 = vpack.c.bf16 %v226, %v222
    %v231 = vpack.c.bf16 %v227, %v223
    %v236 = vunpack.c.l.b16 %v228
    %v237 = vunpack.c.l.b16 %v229
    %v238 = vunpack.c.l.b16 %v230
    %v239 = vunpack.c.l.b16 %v231
    %v240 = vunpack.c.h.b16 %v228
    %v241 = vunpack.c.h.b16 %v229
    %v242 = vunpack.c.h.b16 %v230
    %v243 = vunpack.c.h.b16 %v231
    %v244 = vpack.c.b16 %v237, %v236
    %v245 = vpack.c.b16 %v239, %v238
    %v246 = vpack.c.b16 %v241, %v240
    %v247 = vpack.c.b16 %v243, %v242
    %252 = vst [vmem:[%s5] sm:$0xff] %v244
    %253 = vst [vmem:[%s5 + $0x8] sm:$0xff] %v245
    %254 = vst [vmem:[%s5 + $0x10] sm:$0xff] %v246
    %255 = vst [vmem:[%s5 + $0x18] sm:$0xff] %v247
    %v256 = vld [vmem:[#allocation2] sm:$0xf]
    %v257 = vld [vmem:[#allocation2 + $0x4] sm:$0xf]
    %v258 = vld [vmem:[#allocation2 + $0x8] sm:$0xf]
    %v259 = vld [vmem:[#allocation2 + $0xc] sm:$0xf]
    %v260 = vld [vmem:[#allocation2 + $0x10] sm:$0xf]
    %v261 = vld [vmem:[#allocation2 + $0x14] sm:$0xf]
    %v262 = vld [vmem:[#allocation2 + $0x18] sm:$0xf]
    %v263 = vld [vmem:[#allocation2 + $0x1c] sm:$0xf]
    %v264 = vld [vmem:[#allocation2 + $0x20] sm:$0xf]
    %v265 = vld [vmem:[#allocation2 + $0x24] sm:$0xf]
    %v266 = vld [vmem:[#allocation2 + $0x28] sm:$0xf]
    %v267 = vld [vmem:[#allocation2 + $0x2c] sm:$0xf]
    %v268 = vld [vmem:[#allocation2 + $0x30] sm:$0xf]
    %v269 = vld [vmem:[#allocation2 + $0x34] sm:$0xf]
    %v270 = vld [vmem:[#allocation2 + $0x38] sm:$0xf]
    %v271 = vld [vmem:[#allocation2 + $0x3c] sm:$0xf]
    %v272 = vld [vmem:[#allocation2 + $0x40] sm:$0xf]
    %v273 = vld [vmem:[#allocation2 + $0x44] sm:$0xf]
    %v274 = vld [vmem:[#allocation2 + $0x48] sm:$0xf]
    %v275 = vld [vmem:[#allocation2 + $0x4c] sm:$0xf]
    %v276 = vld [vmem:[#allocation2 + $0x50] sm:$0xf]
    %v277 = vld [vmem:[#allocation2 + $0x54] sm:$0xf]
    %v278 = vld [vmem:[#allocation2 + $0x58] sm:$0xf]
    %v279 = vld [vmem:[#allocation2 + $0x5c] sm:$0xf]
    %v280 = vld [vmem:[#allocation2 + $0x60] sm:$0xf]
    %v281 = vld [vmem:[#allocation2 + $0x64] sm:$0xf]
    %v282 = vld [vmem:[#allocation2 + $0x68] sm:$0xf]
    %v283 = vld [vmem:[#allocation2 + $0x6c] sm:$0xf]
    %v284 = vld [vmem:[#allocation2 + $0x70] sm:$0xf]
    %v285 = vld [vmem:[#allocation2 + $0x74] sm:$0xf]
    %v286 = vld [vmem:[#allocation2 + $0x78] sm:$0xf]
    %v287 = vld [vmem:[#allocation2 + $0x7c] sm:$0xf]
    %v288 = vld [vmem:[#allocation2 + $0x80] sm:$0xf]
    %v289 = vld [vmem:[#allocation2 + $0x84] sm:$0xf]
    %v290 = vld [vmem:[#allocation2 + $0x88] sm:$0xf]
    %v291 = vld [vmem:[#allocation2 + $0x8c] sm:$0xf]
    %v292 = vld [vmem:[#allocation2 + $0x90] sm:$0xf]
    %v293 = vld [vmem:[#allocation2 + $0x94] sm:$0xf]
    %v294 = vld [vmem:[#allocation2 + $0x98] sm:$0xf]
    %v295 = vld [vmem:[#allocation2 + $0x9c] sm:$0xf]
    %v296 = vld [vmem:[#allocation2 + $0xa0] sm:$0xf]
    %v297 = vld [vmem:[#allocation2 + $0xa4] sm:$0xf]
    %v298 = vld [vmem:[#allocation2 + $0xa8] sm:$0xf]
    %v299 = vld [vmem:[#allocation2 + $0xac] sm:$0xf]
    %v300 = vld [vmem:[#allocation2 + $0xb0] sm:$0xf]
    %v301 = vld [vmem:[#allocation2 + $0xb4] sm:$0xf]
    %v302 = vld [vmem:[#allocation2 + $0xb8] sm:$0xf]
    %v303 = vld [vmem:[#allocation2 + $0xbc] sm:$0xf]
    %v304 = vld [vmem:[#allocation2 + $0xc0] sm:$0xf]
    %v305 = vld [vmem:[#allocation2 + $0xc4] sm:$0xf]
    %v306 = vld [vmem:[#allocation2 + $0xc8] sm:$0xf]
    %v307 = vld [vmem:[#allocation2 + $0xcc] sm:$0xf]
    %v308 = vld [vmem:[#allocation2 + $0xd0] sm:$0xf]
    %v309 = vld [vmem:[#allocation2 + $0xd4] sm:$0xf]
    %v310 = vld [vmem:[#allocation2 + $0xd8] sm:$0xf]
    %v311 = vld [vmem:[#allocation2 + $0xdc] sm:$0xf]
    %v312 = vld [vmem:[#allocation2 + $0xe0] sm:$0xf]
    %v313 = vld [vmem:[#allocation2 + $0xe4] sm:$0xf]
    %v314 = vld [vmem:[#allocation2 + $0xe8] sm:$0xf]
    %v315 = vld [vmem:[#allocation2 + $0xec] sm:$0xf]
    %v316 = vld [vmem:[#allocation2 + $0xf0] sm:$0xf]
    %v317 = vld [vmem:[#allocation2 + $0xf4] sm:$0xf]
    %v318 = vld [vmem:[#allocation2 + $0xf8] sm:$0xf]
    %v319 = vld [vmem:[#allocation2 + $0xfc] sm:$0xf]
    %v320 = vld [vmem:[%s4] sm:$0x1]
    %v322 = vlaneseq
    %v323 = vshrl.u32 %v322, 7
    %v324 = vsub.s32 0, %v323
    %v325 = vrot.slane %v320, %v324
    %v391 = vunpack.c.l.b16 %v256
    %v392 = vunpack.c.l.b16 %v257
    %v393 = vunpack.c.l.b16 %v258
    %v394 = vunpack.c.l.b16 %v259
    %v395 = vunpack.c.l.b16 %v260
    %v396 = vunpack.c.l.b16 %v261
    %v397 = vunpack.c.l.b16 %v262
    %v398 = vunpack.c.l.b16 %v263
    %v399 = vunpack.c.l.b16 %v264
    %v400 = vunpack.c.l.b16 %v265
    %v401 = vunpack.c.l.b16 %v266
    %v402 = vunpack.c.l.b16 %v267
    %v403 = vunpack.c.l.b16 %v268
    %v404 = vunpack.c.l.b16 %v269
    %v405 = vunpack.c.l.b16 %v270
    %v406 = vunpack.c.l.b16 %v271
    %v407 = vunpack.c.l.b16 %v272
    %v408 = vunpack.c.l.b16 %v273
    %v409 = vunpack.c.l.b16 %v274
    %v410 = vunpack.c.l.b16 %v275
    %v411 = vunpack.c.l.b16 %v276
    %v412 = vunpack.c.l.b16 %v277
    %v413 = vunpack.c.l.b16 %v278
    %v414 = vunpack.c.l.b16 %v279
    %v415 = vunpack.c.l.b16 %v280
    %v416 = vunpack.c.l.b16 %v281
    %v417 = vunpack.c.l.b16 %v282
    %v418 = vunpack.c.l.b16 %v283
    %v419 = vunpack.c.l.b16 %v284
    %v420 = vunpack.c.l.b16 %v285
    %v421 = vunpack.c.l.b16 %v286
    %v422 = vunpack.c.l.b16 %v287
    %v423 = vunpack.c.l.b16 %v288
    %v424 = vunpack.c.l.b16 %v289
    %v425 = vunpack.c.l.b16 %v290
    %v426 = vunpack.c.l.b16 %v291
    %v427 = vunpack.c.l.b16 %v292
    %v428 = vunpack.c.l.b16 %v293
    %v429 = vunpack.c.l.b16 %v294
    %v430 = vunpack.c.l.b16 %v295
    %v431 = vunpack.c.l.b16 %v296
    %v432 = vunpack.c.l.b16 %v297
    %v433 = vunpack.c.l.b16 %v298
    %v434 = vunpack.c.l.b16 %v299
    %v435 = vunpack.c.l.b16 %v300
    %v436 = vunpack.c.l.b16 %v301
    %v437 = vunpack.c.l.b16 %v302
    %v438 = vunpack.c.l.b16 %v303
    %v439 = vunpack.c.l.b16 %v304
    %v440 = vunpack.c.l.b16 %v305
    %v441 = vunpack.c.l.b16 %v306
    %v442 = vunpack.c.l.b16 %v307
    %v443 = vunpack.c.l.b16 %v308
    %v444 = vunpack.c.l.b16 %v309
    %v445 = vunpack.c.l.b16 %v310
    %v446 = vunpack.c.l.b16 %v311
    %v447 = vunpack.c.l.b16 %v312
    %v448 = vunpack.c.l.b16 %v313
    %v449 = vunpack.c.l.b16 %v314
    %v450 = vunpack.c.l.b16 %v315
    %v451 = vunpack.c.l.b16 %v316
    %v452 = vunpack.c.l.b16 %v317
    %v453 = vunpack.c.l.b16 %v318
    %v454 = vunpack.c.l.b16 %v319
    %v455 = vpack.c.b16 %v392, %v391
    %v456 = vpack.c.b16 %v394, %v393
    %v457 = vpack.c.b16 %v396, %v395
    %v458 = vpack.c.b16 %v398, %v397
    %v459 = vpack.c.b16 %v400, %v399
    %v460 = vpack.c.b16 %v402, %v401
    %v461 = vpack.c.b16 %v404, %v403
    %v462 = vpack.c.b16 %v406, %v405
    %v463 = vpack.c.b16 %v408, %v407
    %v464 = vpack.c.b16 %v410, %v409
    %v465 = vpack.c.b16 %v412, %v411
    %v466 = vpack.c.b16 %v414, %v413
    %v467 = vpack.c.b16 %v416, %v415
    %v468 = vpack.c.b16 %v418, %v417
    %v469 = vpack.c.b16 %v420, %v419
    %v470 = vpack.c.b16 %v422, %v421
    %v471 = vpack.c.b16 %v424, %v423
    %v472 = vpack.c.b16 %v426, %v425
    %v473 = vpack.c.b16 %v428, %v427
    %v474 = vpack.c.b16 %v430, %v429
    %v475 = vpack.c.b16 %v432, %v431
    %v476 = vpack.c.b16 %v434, %v433
    %v477 = vpack.c.b16 %v436, %v435
    %v478 = vpack.c.b16 %v438, %v437
    %v479 = vpack.c.b16 %v440, %v439
    %v480 = vpack.c.b16 %v442, %v441
    %v481 = vpack.c.b16 %v444, %v443
    %v482 = vpack.c.b16 %v446, %v445
    %v483 = vpack.c.b16 %v448, %v447
    %v484 = vpack.c.b16 %v450, %v449
    %v485 = vpack.c.b16 %v452, %v451
    %v486 = vpack.c.b16 %v454, %v453
    %519 = vmatprep.subr.bf16.mxu0 0
    %520 = vmatpush1.bf16.msra.mxu0 %v455
    %521 = vmatprep.subr.bf16.mxu0 0
    %522 = vmatpush1.bf16.msra.mxu0 %v456
    %523 = vmatprep.subr.bf16.mxu0 0
    %524 = vmatpush1.bf16.msra.mxu0 %v457
    %525 = vmatprep.subr.bf16.mxu0 0
    %526 = vmatpush1.bf16.msra.mxu0 %v458
    %527 = vmatprep.subr.bf16.mxu0 0
    %528 = vmatpush1.bf16.msra.mxu0 %v459
    %529 = vmatprep.subr.bf16.mxu0 0
    %530 = vmatpush1.bf16.msra.mxu0 %v460
    %531 = vmatprep.subr.bf16.mxu0 0
    %532 = vmatpush1.bf16.msra.mxu0 %v461
    %533 = vmatprep.subr.bf16.mxu0 0
    %534 = vmatpush1.bf16.msra.mxu0 %v462
    %535 = vmatprep.subr.bf16.mxu0 0
    %536 = vmatpush1.bf16.msra.mxu0 %v463
    %537 = vmatprep.subr.bf16.mxu0 0
    %538 = vmatpush1.bf16.msra.mxu0 %v464
    %539 = vmatprep.subr.bf16.mxu0 0
    %540 = vmatpush1.bf16.msra.mxu0 %v465
    %541 = vmatprep.subr.bf16.mxu0 0
    %542 = vmatpush1.bf16.msra.mxu0 %v466
    %543 = vmatprep.subr.bf16.mxu0 0
    %544 = vmatpush1.bf16.msra.mxu0 %v467
    %545 = vmatprep.subr.bf16.mxu0 0
    %546 = vmatpush1.bf16.msra.mxu0 %v468
    %547 = vmatprep.subr.bf16.mxu0 0
    %548 = vmatpush1.bf16.msra.mxu0 %v469
    %549 = vmatprep.subr.bf16.mxu0 0
    %550 = vmatpush1.bf16.msra.mxu0 %v470
    %551 = vmatprep.mubr.bf16.mxu0 %v229
    %552 = vmatmul.mubr.bf16.gmra.mrb[0].mxu0 %v228
    %v553 = vpop.f32.mrb[0].mxu0
    %v554 = vadd.f32 %v325, %v553
    %v555 = vpop.f32.mrb[0].mxu0
    %v556 = vpop.f32.mrb[0].mxu0
    %v557 = vadd.f32 %v325, %v556
    %v558 = vpop.f32.mrb[0].mxu0
    %559 = vdwg.mxu0
    %560 = vmatprep.subr.bf16.mxu0 0
    %561 = vmatpush1.bf16.msra.mxu0 %v471
    %562 = vmatprep.subr.bf16.mxu0 0
    %563 = vmatpush1.bf16.msra.mxu0 %v472
    %564 = vmatprep.subr.bf16.mxu0 0
    %565 = vmatpush1.bf16.msra.mxu0 %v473
    %566 = vmatprep.subr.bf16.mxu0 0
    %567 = vmatpush1.bf16.msra.mxu0 %v474
    %568 = vmatprep.subr.bf16.mxu0 0
    %569 = vmatpush1.bf16.msra.mxu0 %v475
    %570 = vmatprep.subr.bf16.mxu0 0
    %571 = vmatpush1.bf16.msra.mxu0 %v476
    %572 = vmatprep.subr.bf16.mxu0 0
    %573 = vmatpush1.bf16.msra.mxu0 %v477
    %574 = vmatprep.subr.bf16.mxu0 0
    %575 = vmatpush1.bf16.msra.mxu0 %v478
    %576 = vmatprep.subr.bf16.mxu0 0
    %577 = vmatpush1.bf16.msra.mxu0 %v479
    %578 = vmatprep.subr.bf16.mxu0 0
    %579 = vmatpush1.bf16.msra.mxu0 %v480
    %580 = vmatprep.subr.bf16.mxu0 0
    %581 = vmatpush1.bf16.msra.mxu0 %v481
    %582 = vmatprep.subr.bf16.mxu0 0
    %583 = vmatpush1.bf16.msra.mxu0 %v482
    %584 = vmatprep.subr.bf16.mxu0 0
    %585 = vmatpush1.bf16.msra.mxu0 %v483
    %586 = vmatprep.subr.bf16.mxu0 0
    %587 = vmatpush1.bf16.msra.mxu0 %v484
    %588 = vmatprep.subr.bf16.mxu0 0
    %589 = vmatpush1.bf16.msra.mxu0 %v485
    %590 = vmatprep.subr.bf16.mxu0 0
    %591 = vmatpush1.bf16.msra.mxu0 %v486
    %592 = vmatprep.mubr.bf16.mxu0 %v231
    %593 = vmatmul.mubr.bf16.gmra.mrb[0].mxu0 %v230
    %v594 = vpop.f32.mrb[0].mxu0
    %v595 = vadd.f32 %v554, %v594
    %v596 = vpop.f32.mrb[0].mxu0
    %v597 = vpop.f32.mrb[0].mxu0
    %v598 = vadd.f32 %v557, %v597
    %v599 = vpop.f32.mrb[0].mxu0
    %600 = vdwg.mxu0
    %601 = vst [vmem:[%s6] sm:$0xff] %v595
    %602 = vst [vmem:[%s6 + $0x8] sm:$0xff] %v598
    // Predicated region
    $region26: #{zerogen_forward.1} parent=1 // pred_check
      _
    $region27: #{zerogen_forward.1} parent=1 // pred_check_branch
      %604 = sbr.rel (0) target = $region29
    $region28: #{zerogen_forward.1} parent=1 // pred_region
      _
    $region29: #{zerogen_forward.1} parent=1 // pred_fallthru
      _
    // Predicated region
    $region30: #{zerogen_forward.1} parent=1 // pred_check
      _
    $region31: #{zerogen_forward.1} parent=1 // pred_check_branch
      %606 = sbr.rel (0) target = $region33
    $region32: #{zerogen_forward.1} parent=1 // pred_region
      _
    $region33: #{zerogen_forward.1} parent=1 // pred_fallthru
      _
    // Predicated region
    $region34: #{zerogen_forward.1} parent=1 // pred_check
      _
    $region35: #{zerogen_forward.1} parent=1 // pred_check_branch
      %608 = sbr.rel (0) target = $region37
    $region36: #{zerogen_forward.1} parent=1 // pred_region
      _
    $region37: #{zerogen_forward.1} parent=1 // pred_fallthru
      _
    // Predicated region
    $region38: #{zerogen_forward.1} parent=1 // pred_check
      _
    $region39: #{zerogen_forward.1} parent=1 // pred_check_branch
      %610 = sbr.rel (0) target = $region41
    $region40: #{zerogen_forward.1} parent=1 // pred_region
      _
    $region41: #{zerogen_forward.1} parent=1 // pred_fallthru
      _
    %611 = vsyncpa [#allocation3], 1

</llo_original>
